<compile_context>
chip_gen: v6e
topology: v6e:2x2x1
jax: 0.10.0
libtpu: 0.0.40
codegen_flags: <defaults>
</compile_context>

<pallas_src>
import numpy as np
import jax
import jax.numpy as jnp
from jax.experimental import pallas as pl
from jax.experimental.pallas import tpu as pltpu


def get_sinusoid_table(num_tokens: int, token_len: int) -> np.ndarray:
    """Same math as the PyTorch reference (float64 table, cast later)."""
    j = np.arange(token_len)
    i = np.arange(num_tokens)[:, None]
    angles = i / np.power(10000.0, 2 * (j // 2) / token_len)  # (num_tokens, token_len)
    table = np.array(angles, dtype=np.float64)
    table[:, 0::2] = np.sin(table[:, 0::2])
    table[:, 1::2] = np.cos(table[:, 1::2])
    return table


def _add_pe_kernel(x_ref, pe_ref, o_ref):
    # x block: (TB, TC); pe block: (1, TC) -> sublane-broadcast add on the VPU.
    o_ref[...] = x_ref[...] + pe_ref[...]


def _choose_tiles(B: int, ND: int, itemsize: int):
    """Pick (row_tile, lane_tile): ~2 MiB lane-dense blocks, sublane-aligned rows."""
    target_elems = (2 * 1024 * 1024) // itemsize  # ~2 MiB per x/out block

    # Lane (last-dim) tile: a multiple of 128 when possible, else the full
    # extent (a full-extent block is always legal).
    if ND % 128 == 0:
        tc = min(ND, max(128, ((target_elems // 8) // 128) * 128))
    else:
        tc = ND

    # Sublane (row) tile: full batch when B <= 8, else a multiple of 8 sized to
    # roughly fill the per-block byte budget (clamped so a block never blows
    # past ~2x the budget even for awkward ND).
    if B <= 8:
        tb = B
    else:
        want = max(8, target_elems // max(tc, 1))
        tb = max(8, min((B // 8) * 8, (want // 8) * 8))
    return tb, tc


def positional_encoding_forward(patches: jax.Array, pe_table: jax.Array) -> jax.Array:
    """patches: (B, N, D); pe_table: (1, N, D) -> (B, N, D) = patches + pe."""
    B, N, D = patches.shape
    assert pe_table.shape == (1, N, D)
    ND = N * D

    # Lane-dense 2D views; PE cast once to the activation dtype (no-op for f32).
    x2 = patches.reshape(B, ND)
    pe2 = pe_table.reshape(1, ND).astype(patches.dtype)

    tb, tc = _choose_tiles(B, ND, patches.dtype.itemsize)

    # Lane-tile axis OUTER, row-tile axis INNER: the PE block index only
    # depends on the outer axis, so its DMA is skipped on inner-axis steps.
    grid = (pl.cdiv(ND, tc), pl.cdiv(B, tb))

    out2 = pl.pallas_call(
        _add_pe_kernel,
        out_shape=jax.ShapeDtypeStruct((B, ND), patches.dtype),
        grid=grid,
        in_specs=[
            pl.BlockSpec((tb, tc), lambda j, i: (i, j)),   # activations
            pl.BlockSpec((1, tc), lambda j, i: (0, j)),    # PE table (batch-invariant)
        ],
        out_specs=pl.BlockSpec((tb, tc), lambda j, i: (i, j)),
        compiler_params=pltpu.CompilerParams(
            dimension_semantics=("parallel", "parallel"),
            vmem_limit_bytes=32 * 1024 * 1024,
        ),
    )(x2, pe2)

    return out2.reshape(B, N, D)


class PositionalEncoding:
    """JAX/Pallas equivalent of the PyTorch PositionalEncoding module."""

    def __init__(self, number_of_tokens: int, size_of_token_embedding: int):
        # torch.FloatTensor(...) -> float32, unsqueeze(0) -> (1, N, D)
        self.layer = jnp.asarray(
            get_sinusoid_table(number_of_tokens, size_of_token_embedding),
            dtype=jnp.float32,
        )[None, :, :]

    def __call__(self, patches: jax.Array) -> jax.Array:
        return positional_encoding_forward(patches, self.layer)


if __name__ == "__main__":
    batch = 2
    number_of_tokens = 8
    size_of_token_embedding = 32

    key = jax.random.PRNGKey(0)
    patches = jax.random.normal(
        key, (batch, number_of_tokens, size_of_token_embedding), dtype=jnp.float32
    )

    module = PositionalEncoding(number_of_tokens, size_of_token_embedding)
    out = module(patches)
    out = jax.block_until_ready(out)

    # Sanity check against the plain-JAX reference.
    ref = patches + module.layer
    assert out.shape == (batch, number_of_tokens, size_of_token_embedding)
    assert jnp.allclose(out, ref, atol=1e-6, rtol=1e-6)

    print("KERNEL_OK")
</pallas_src>

<mosaic_0001>
module attributes {stable_mosaic.version = 11 : i64} {
  func.func @_add_pe_kernel(%arg0: i32, %arg1: i32, %arg2: memref<2x256xf32, #tpu.memory_space<vmem>>, %arg3: memref<1x256xf32, #tpu.memory_space<vmem>>, %arg4: memref<2x256xf32, #tpu.memory_space<vmem>>) attributes {dimension_semantics = [#tpu.dimension_semantics<parallel>, #tpu.dimension_semantics<parallel>], iteration_bounds = array<i64: 1, 1>, scalar_prefetch = 0 : i64, scratch_operands = 0 : i64, tpu.core_type = #tpu.core_type<tc>, window_params = [{transform_indices = @transform_0, window_bounds = array<i64: 2, 256>}, {transform_indices = @transform_1, window_bounds = array<i64: 1, 256>}, {transform_indices = @transform_2, window_bounds = array<i64: 2, 256>}]} {
    %c0 = arith.constant 0 : index
    %c0_0 = arith.constant 0 : index
    %0 = vector.load %arg2[%c0, %c0_0] : memref<2x256xf32, #tpu.memory_space<vmem>>, vector<2x256xf32>
    %c0_1 = arith.constant 0 : index
    %c0_2 = arith.constant 0 : index
    %1 = vector.load %arg3[%c0_1, %c0_2] : memref<1x256xf32, #tpu.memory_space<vmem>>, vector<1x256xf32>
    %2 = vector.broadcast %1 : vector<1x256xf32> to vector<2x256xf32>
    %3 = arith.addf %0, %2 : vector<2x256xf32>
    %c0_3 = arith.constant 0 : index
    %c0_4 = arith.constant 0 : index
    %4 = vector.load %arg4[%c0_3, %c0_4] : memref<2x256xf32, #tpu.memory_space<vmem>>, vector<2x256xf32>
    tpu.vector_store %arg4[%c0_3, %c0_4], %3 {strides = array<i32>} : memref<2x256xf32, #tpu.memory_space<vmem>>, vector<2x256xf32>,
    return
  }
  func.func @transform_0(%arg0: i32, %arg1: i32) -> (i32, i32) {
    %c0_i32 = arith.constant 0 : i32
    return %arg1, %arg0 : i32, i32
  }
  func.func @transform_1(%arg0: i32, %arg1: i32) -> (i32, i32) {
    %c0_i32 = arith.constant 0 : i32
    %c0_i32_0 = arith.constant 0 : i32
    return %c0_i32, %arg0 : i32, i32
  }
  func.func @transform_2(%arg0: i32, %arg1: i32) -> (i32, i32) {
    %c0_i32 = arith.constant 0 : i32
    return %arg1, %arg0 : i32, i32
  }
}

</mosaic_0001>

<llo_original>
// kernel: tpu_custom_call.1
$region0: #{tpu_custom_call.1}
  #allocation0 [shape = 'u32[]', space=smem, size = 0x4, offset = 0x4, fixed_abs, tag = 'smem constant byte address 0x4 - core index']
  #allocation1 [shape = 'u32[144,128]{1,0:T(1,128)}', space=vmem, size = 0x12000, scoped, tag = 'internal scratch']
  %s0 = inlined_call_operand.hbm [shape: f32[2,256], index: 0, kind: input, shape index: {}]
  %s1 = inlined_call_operand.hbm [shape: f32[1,256], index: 1, kind: input, shape index: {}]
  %s2 = inlined_call_operand.hbm [shape: f32[2,256], index: 2, kind: output, shape index: {}]
  %s3 = sld [smem:[#allocation0]]
  $region26: #{tpu_custom_call.1} parent=0
    _
  %s5 = ssub.s32 1, %s3
  %s6 = scalar_select 0, %s5, %s3
  $region1: #{tpu_custom_call.1} parent=0
    #allocation2 [shape = 'u8[2048]{0}', space=vmem, size = 0x800, scoped, tag = 'input window, operand 0, single buffered']
    #allocation3 [shape = 's32[1]{0}', space=sflag, size = 0x4, scoped, tag = 'scoped memory for tpu_custom_call.1']
    #allocation4 [shape = 's32[1]{0}', space=sflag, size = 0x4, scoped, tag = 'scoped memory for tpu_custom_call.1']
    #allocation5 [shape = 'u8[1024]{0}', space=vmem, size = 0x400, scoped, tag = 'input window, operand 1, single buffered']
    #allocation6 [shape = 's32[1]{0}', space=sflag, size = 0x4, scoped, tag = 'scoped memory for tpu_custom_call.1']
    #allocation7 [shape = 'u8[2048]{0}', space=vmem, size = 0x800, scoped, tag = 'output window, operand 0, single buffered']
    %7 = vsyncpa [#allocation3], 0
    %8 = vsyncpa [#allocation6], 0
    %9 = vsyncpa [#allocation4], 0
    // Predicated region
    $region2: #{tpu_custom_call.1} parent=1 // pred_check
      _
    $region3: #{tpu_custom_call.1} parent=1 // pred_check_branch
      %11 = sbr.rel (0) target = $region5
    $region4: #{tpu_custom_call.1} parent=1 // pred_region
      %s13 = ssub.s32 64, 64
      %14 = vsyncadd [#allocation3], %s13
      %s16 = sshll.u32 [#allocation2], 4
      %s17 = int_to_ptr.vmem [resolvable:$true] %s16
      %19 = dma.hbm_to_vmem [thread:$0]  %s0, 64, %s17, [#allocation3]
    $region5: #{tpu_custom_call.1} parent=1 // pred_fallthru
      _
    // Predicated region
    $region6: #{tpu_custom_call.1} parent=1 // pred_check
      _
    $region7: #{tpu_custom_call.1} parent=1 // pred_check_branch
      %21 = sbr.rel (0) target = $region9
    $region8: #{tpu_custom_call.1} parent=1 // pred_region
      %s23 = ssub.s32 32, 32
      %24 = vsyncadd [#allocation6], %s23
      %s26 = sshll.u32 [#allocation5], 4
      %s27 = int_to_ptr.vmem [resolvable:$true] %s26
      %29 = dma.hbm_to_vmem [thread:$0]  %s1, 32, %s27, [#allocation6]
    $region9: #{tpu_custom_call.1} parent=1 // pred_fallthru
      _
    // Predicated region
    $region10: #{tpu_custom_call.1} parent=1 // pred_check
      _
    $region11: #{tpu_custom_call.1} parent=1 // pred_check_branch
      %31 = sbr.rel (0) target = $region13
    $region12: #{tpu_custom_call.1} parent=1 // pred_region
      %32 = dma.done [#allocation3], 64
    $region13: #{tpu_custom_call.1} parent=1 // pred_fallthru
      _
    // Predicated region
    $region14: #{tpu_custom_call.1} parent=1 // pred_check
      _
    $region15: #{tpu_custom_call.1} parent=1 // pred_check_branch
      %34 = sbr.rel (0) target = $region17
    $region16: #{tpu_custom_call.1} parent=1 // pred_region
      %35 = dma.done [#allocation6], 32
    $region17: #{tpu_custom_call.1} parent=1 // pred_fallthru
      _
    %v36 = vld [vmem:[#allocation2] sm:$0xf]
    %v37 = vld [vmem:[#allocation5] sm:$0x3]
    %v39 = vlaneseq
    %v40 = vshrl.u32 %v39, 7
    %v41 = vsub.s32 0, %v40
    %v42 = vrot.slane %v37, %v41
    %v43 = vlaneseq
    %v44 = vshrl.u32 %v43, 7
    %v45 = vsub.s32 1, %v44
    %v46 = vrot.slane %v37, %v45
    %v47 = vcombine.low %v42, %v46
    %v49 = vunpack.c.l.s4 1983009808
    %v50 = vunpack.c.0.s8 %v49
    %v51 = vlaneseq
    %v52 = vshrl.u32 %v51, 7
    %v53 = vsub.s32 %v50, %v52
    %v54 = vrot.slane %v47, %v53
    %v56 = vadd.f32 %v36, %v54
    %57 = vst [vmem:[#allocation7] sm:$0xf] %v56
    // Predicated region
    $region18: #{tpu_custom_call.1} parent=1 // pred_check
      _
    $region19: #{tpu_custom_call.1} parent=1 // pred_check_branch
      %59 = sbr.rel (0) target = $region21
    $region20: #{tpu_custom_call.1} parent=1 // pred_region
      %s61 = ssub.s32 64, 64
      %62 = vsyncadd [#allocation4], %s61
      %s64 = sshll.u32 [#allocation7], 4
      %s65 = int_to_ptr.vmem [resolvable:$true] %s64
      %67 = dma.vmem_to_hbm [thread:$0]  %s65, 64, %s2, [#allocation4]
    $region21: #{tpu_custom_call.1} parent=1 // pred_fallthru
      _
    // Predicated region
    $region22: #{tpu_custom_call.1} parent=1 // pred_check
      _
    $region23: #{tpu_custom_call.1} parent=1 // pred_check_branch
      %69 = sbr.rel (0) target = $region25
    $region24: #{tpu_custom_call.1} parent=1 // pred_region
      %70 = dma.done [#allocation4], 64
    $region25: #{tpu_custom_call.1} parent=1 // pred_fallthru
      _
    %71 = vsyncpa [#allocation3], 1
    %72 = vsyncpa [#allocation6], 1
    %73 = vsyncpa [#allocation4], 1

</llo_original>
